<compile_context>
chip_gen: v5e
topology: v5e:2x2
jax: 0.10.0
libtpu: 0.0.40
codegen_flags: <defaults>
</compile_context>

<pallas_src>
import math

import jax
import jax.numpy as jnp
from jax.experimental import pallas as pl
from jax.experimental.pallas import tpu as pltpu


def _build_pos_emb(hidden_dim: int, max_len: int = 5000) -> jnp.ndarray:
    """Deterministic sinusoidal table, identical to the PyTorch __init__."""
    position = jnp.arange(max_len, dtype=jnp.float32)[:, None]          # (max_len, 1)
    div_term = jnp.exp(
        jnp.arange(0, hidden_dim, 2, dtype=jnp.float32)
        * (-math.log(10000.0) / hidden_dim)
    )                                                                    # (hidden_dim/2,)
    pe = jnp.zeros((max_len, hidden_dim), dtype=jnp.float32)
    pe = pe.at[:, 0::2].set(jnp.sin(position * div_term))
    pe = pe.at[:, 1::2].set(jnp.cos(position * div_term))
    return pe[None]                                                      # (1, max_len, hidden_dim)


def _pe_add_kernel(x_ref, pe_ref, o_ref):
    # x_ref/o_ref: (Bb, Lt) lane-dense tile; pe_ref: (1, Lt) shared table tile.
    # Broadcast add over the batch (sublane) axis.
    o_ref[...] = x_ref[...] + pe_ref[...]


def _plan_tiles(B: int, L: int, itemsize: int, target_tile_bytes: int = 2 * 1024 * 1024):
    """Pick (rows, lanes) block shape: rows fill sublanes, lanes ~2 MiB / mult of 128."""
    # Rows (sublane axis): full B if small (legal as full-dim), else 8-row tiles.
    bb = B if B <= 8 else 8
    # Lanes: multiple of 128 sized so one x/out tile is ~target_tile_bytes,
    # or the full folded length if it already fits (full-dim is always legal).
    budget = max(128, (target_tile_bytes // (bb * itemsize)) // 128 * 128)
    lt = L if L <= budget else budget
    return bb, lt


def positional_encoding_forward(
    x: jnp.ndarray,
    pos_emb: jnp.ndarray,
    *,
    force_pallas: bool = False,
    tile_rows: int = None,
    tile_lanes: int = None,
) -> jnp.ndarray:
    """x: (B, S, H); pos_emb: (1, max_len, H). Returns x + pos_emb[:, :S]."""
    B, S, H = x.shape
    pe = pos_emb[:, :S, :].astype(x.dtype)            # (1, S, H) static slice (plain-JAX glue)

    itemsize = jnp.dtype(x.dtype).itemsize
    total_bytes = B * S * H * itemsize

    # Small-problem fast path: pallas_call launch overhead dwarfs a few-KB add.
    if not force_pallas and total_bytes < 256 * 1024:
        return x + pe

    # Lane-dense fold: last dim presented to the store unit is S*H (>=128-wide).
    L = S * H
    x2 = x.reshape(B, L)
    pe2 = pe.reshape(1, L)

    bb, lt = _plan_tiles(B, L, itemsize)
    if tile_rows is not None:
        bb = tile_rows
    if tile_lanes is not None:
        lt = tile_lanes

    n_l = pl.cdiv(L, lt)
    n_b = pl.cdiv(B, bb)

    out2 = pl.pallas_call(
        _pe_add_kernel,
        out_shape=jax.ShapeDtypeStruct((B, L), x.dtype),
        grid_spec=pltpu.PrefetchScalarGridSpec(
            num_scalar_prefetch=0,
            # Batch is the innermost grid axis: the PE tile's block index is
            # unchanged across consecutive batch steps, so its DMA is skipped.
            grid=(n_l, n_b),
            in_specs=[
                pl.BlockSpec((bb, lt), lambda l, b: (b, l)),   # x tile
                pl.BlockSpec((1, lt), lambda l, b: (0, l)),    # PE tile (batch-invariant)
            ],
            out_specs=pl.BlockSpec((bb, lt), lambda l, b: (b, l)),
        ),
        compiler_params=pltpu.CompilerParams(
            # Elementwise & fully independent: both axes can shard across
            # TensorCores (matters on v7x's 2-TC megacore).
            dimension_semantics=("parallel", "parallel"),
        ),
    )(x2, pe2)

    return out2.reshape(B, S, H)


if __name__ == "__main__":
    key = jax.random.PRNGKey(0)

    # 1) Spec-sized demo (batch=2, seq=8, hidden=32). Force the Pallas path so
    #    the kernel itself is exercised (production would take the fast path).
    B, S, H = 2, 8, 32
    x = jax.random.normal(key, (B, S, H), dtype=jnp.float32)
    pos_emb = _build_pos_emb(H, max_len=64)

    out = positional_encoding_forward(x, pos_emb, force_pallas=True)
    out = jax.block_until_ready(out)

    ref = x + pos_emb[:, :S, :]
    assert out.shape == (B, S, H)
    assert jnp.allclose(out, ref, atol=1e-6), "mismatch vs reference (pallas path)"

    # Fast path (plain JAX for tiny inputs) must match too.
    out_fast = jax.block_until_ready(positional_encoding_forward(x, pos_emb))
    assert jnp.allclose(out_fast, ref, atol=1e-6), "mismatch vs reference (fast path)"

    # 2) Slightly larger case exercising a multi-tile grid: B=8 fills the
    #    sublane axis, tile_lanes=512 gives 4 lane tiles (grid = (4, 1)).
    B2, S2, H2 = 8, 64, 32
    x2 = jax.random.normal(jax.random.fold_in(key, 1), (B2, S2, H2), dtype=jnp.float32)
    pos_emb2 = _build_pos_emb(H2, max_len=128)

    out2 = positional_encoding_forward(x2, pos_emb2, force_pallas=True, tile_lanes=512)
    out2 = jax.block_until_ready(out2)

    ref2 = x2 + pos_emb2[:, :S2, :]
    assert jnp.allclose(out2, ref2, atol=1e-6), "mismatch vs reference (tiled path)"

    print("KERNEL_OK")
</pallas_src>

<mosaic_0001>
module attributes {stable_mosaic.version = 11 : i64} {
  func.func @_pe_add_kernel(%arg0: i32, %arg1: i32, %arg2: memref<2x256xf32, #tpu.memory_space<vmem>>, %arg3: memref<1x256xf32, #tpu.memory_space<vmem>>, %arg4: memref<2x256xf32, #tpu.memory_space<vmem>>) attributes {dimension_semantics = [#tpu.dimension_semantics<parallel>, #tpu.dimension_semantics<parallel>], iteration_bounds = array<i64: 1, 1>, scalar_prefetch = 0 : i64, scratch_operands = 0 : i64, tpu.core_type = #tpu.core_type<tc>, window_params = [{transform_indices = @transform_0, window_bounds = array<i64: 2, 256>}, {transform_indices = @transform_1, window_bounds = array<i64: 1, 256>}, {transform_indices = @transform_2, window_bounds = array<i64: 2, 256>}]} {
    %c0 = arith.constant 0 : index
    %c0_0 = arith.constant 0 : index
    %0 = vector.load %arg2[%c0, %c0_0] : memref<2x256xf32, #tpu.memory_space<vmem>>, vector<2x256xf32>
    %c0_1 = arith.constant 0 : index
    %c0_2 = arith.constant 0 : index
    %1 = vector.load %arg3[%c0_1, %c0_2] : memref<1x256xf32, #tpu.memory_space<vmem>>, vector<1x256xf32>
    %2 = vector.broadcast %1 : vector<1x256xf32> to vector<2x256xf32>
    %3 = arith.addf %0, %2 : vector<2x256xf32>
    %c0_3 = arith.constant 0 : index
    %c0_4 = arith.constant 0 : index
    %4 = vector.load %arg4[%c0_3, %c0_4] : memref<2x256xf32, #tpu.memory_space<vmem>>, vector<2x256xf32>
    tpu.vector_store %arg4[%c0_3, %c0_4], %3 {strides = array<i32>} : memref<2x256xf32, #tpu.memory_space<vmem>>, vector<2x256xf32>,
    return
  }
  func.func @transform_0(%arg0: i32, %arg1: i32) -> (i32, i32) {
    %c0_i32 = arith.constant 0 : i32
    return %arg1, %arg0 : i32, i32
  }
  func.func @transform_1(%arg0: i32, %arg1: i32) -> (i32, i32) {
    %c0_i32 = arith.constant 0 : i32
    %c0_i32_0 = arith.constant 0 : i32
    return %c0_i32, %arg0 : i32, i32
  }
  func.func @transform_2(%arg0: i32, %arg1: i32) -> (i32, i32) {
    %c0_i32 = arith.constant 0 : i32
    return %arg1, %arg0 : i32, i32
  }
}

</mosaic_0001>

<llo_original>
// kernel: tpu_custom_call.1
$region0: #{tpu_custom_call.1}
  #allocation0 [shape = 'u32[]', space=smem, size = 0x4, offset = 0x4, fixed_abs, tag = 'smem constant byte address 0x4 - core index']
  #allocation1 [shape = 'u32[72,128]{1,0:T(1,128)}', space=vmem, size = 0x9000, scoped, tag = 'internal scratch']
  %s0 = inlined_call_operand.hbm [shape: f32[2,256], index: 0, kind: input, shape index: {}]
  %s1 = inlined_call_operand.hbm [shape: f32[1,256], index: 1, kind: input, shape index: {}]
  %s2 = inlined_call_operand.hbm [shape: f32[2,256], index: 2, kind: output, shape index: {}]
  %s3 = sld [smem:[#allocation0]]
  $region26: #{tpu_custom_call.1} parent=0
    _
  %s5 = ssub.s32 1, %s3
  %s6 = scalar_select 0, %s5, %s3
  $region1: #{tpu_custom_call.1} parent=0
    #allocation2 [shape = 'u8[2048]{0}', space=vmem, size = 0x800, scoped, tag = 'input window, operand 0, single buffered']
    #allocation3 [shape = 's32[1]{0}', space=sflag, size = 0x4, scoped, tag = 'scoped memory for tpu_custom_call.1']
    #allocation4 [shape = 's32[1]{0}', space=sflag, size = 0x4, scoped, tag = 'scoped memory for tpu_custom_call.1']
    #allocation5 [shape = 'u8[1024]{0}', space=vmem, size = 0x400, scoped, tag = 'input window, operand 1, single buffered']
    #allocation6 [shape = 's32[1]{0}', space=sflag, size = 0x4, scoped, tag = 'scoped memory for tpu_custom_call.1']
    #allocation7 [shape = 'u8[2048]{0}', space=vmem, size = 0x800, scoped, tag = 'output window, operand 0, single buffered']
    %7 = vsyncpa [#allocation3], 0
    %8 = vsyncpa [#allocation6], 0
    %9 = vsyncpa [#allocation4], 0
    // Predicated region
    $region2: #{tpu_custom_call.1} parent=1 // pred_check
      _
    $region3: #{tpu_custom_call.1} parent=1 // pred_check_branch
      %11 = sbr.rel (0) target = $region5
    $region4: #{tpu_custom_call.1} parent=1 // pred_region
      %13 = vsyncadd [#allocation3], 0
      %s15 = sshll.u32 %s0, 4
      %s16 = int_to_ptr.hbm [resolvable:$true] %s15
      %s17 = sshll.u32 [#allocation2], 4
      %s18 = int_to_ptr.vmem [resolvable:$true] %s17
      %20 = dma.hbm_to_vmem [thread:$0]  %s16, 64, %s18, [#allocation3]
    $region5: #{tpu_custom_call.1} parent=1 // pred_fallthru
      _
    // Predicated region
    $region6: #{tpu_custom_call.1} parent=1 // pred_check
      _
    $region7: #{tpu_custom_call.1} parent=1 // pred_check_branch
      %22 = sbr.rel (0) target = $region9
    $region8: #{tpu_custom_call.1} parent=1 // pred_region
      %24 = vsyncadd [#allocation6], 0
      %s26 = sshll.u32 %s1, 4
      %s27 = int_to_ptr.hbm [resolvable:$true] %s26
      %s28 = sshll.u32 [#allocation5], 4
      %s29 = int_to_ptr.vmem [resolvable:$true] %s28
      %31 = dma.hbm_to_vmem [thread:$0]  %s27, 32, %s29, [#allocation6]
    $region9: #{tpu_custom_call.1} parent=1 // pred_fallthru
      _
    // Predicated region
    $region10: #{tpu_custom_call.1} parent=1 // pred_check
      _
    $region11: #{tpu_custom_call.1} parent=1 // pred_check_branch
      %33 = sbr.rel (0) target = $region13
    $region12: #{tpu_custom_call.1} parent=1 // pred_region
      %35 = dma.done [#allocation3], 64
    $region13: #{tpu_custom_call.1} parent=1 // pred_fallthru
      _
    // Predicated region
    $region14: #{tpu_custom_call.1} parent=1 // pred_check
      _
    $region15: #{tpu_custom_call.1} parent=1 // pred_check_branch
      %37 = sbr.rel (0) target = $region17
    $region16: #{tpu_custom_call.1} parent=1 // pred_region
      %39 = dma.done [#allocation6], 32
    $region17: #{tpu_custom_call.1} parent=1 // pred_fallthru
      _
    %v40 = vld [vmem:[#allocation2] sm:$0xf]
    %v41 = vld [vmem:[#allocation5] sm:$0x3]
    %v43 = vperm.slane %v41, 0
    %v44 = vperm.slane %v41, 1
    %v45 = vrot.slane %v44, 6
    %vm46 = vcmask 1041408
    %v47 = vsel %vm46, %v43, %v45
    %v49 = vadd.f32 %v40, %v47
    %50 = vst [vmem:[#allocation7] sm:$0xf] %v49
    // Predicated region
    $region18: #{tpu_custom_call.1} parent=1 // pred_check
      _
    $region19: #{tpu_custom_call.1} parent=1 // pred_check_branch
      %52 = sbr.rel (0) target = $region21
    $region20: #{tpu_custom_call.1} parent=1 // pred_region
      %54 = vsyncadd [#allocation4], 0
      %s56 = sshll.u32 [#allocation7], 4
      %s57 = int_to_ptr.vmem [resolvable:$true] %s56
      %s58 = sshll.u32 %s2, 4
      %s59 = int_to_ptr.hbm [resolvable:$true] %s58
      %61 = dma.vmem_to_hbm [thread:$0]  %s57, 64, %s59, [#allocation4]
    $region21: #{tpu_custom_call.1} parent=1 // pred_fallthru
      _
    // Predicated region
    $region22: #{tpu_custom_call.1} parent=1 // pred_check
      _
    $region23: #{tpu_custom_call.1} parent=1 // pred_check_branch
      %63 = sbr.rel (0) target = $region25
    $region24: #{tpu_custom_call.1} parent=1 // pred_region
      %65 = dma.done [#allocation4], 64
    $region25: #{tpu_custom_call.1} parent=1 // pred_fallthru
      _
    %66 = vsyncpa [#allocation3], 1
    %67 = vsyncpa [#allocation6], 1
    %68 = vsyncpa [#allocation4], 1

</llo_original>
